<compile_context>
chip_gen: v5e
topology: v5e:2x2
jax: 0.10.0
libtpu: 0.0.40
codegen_flags: <defaults>
</compile_context>

<pallas_src>
import functools

import jax
import jax.numpy as jnp
from jax.experimental import pallas as pl
from jax.experimental.pallas import tpu as pltpu

_EPS = 1e-6


def _vmem_capacity_bytes():
    """Physical VMEM per TensorCore (trace-time query; conservative fallback)."""
    try:
        info = pltpu.get_tpu_info()
        cap = getattr(info, "vmem_capacity_bytes", None)
        if cap:
            return int(cap)
    except Exception:
        pass
    return 64 * 1024 * 1024  # v7x per-TC VMEM (conservative)


def _largest_col_tile(n_padded, cap, mult=128):
    """Largest multiple of `mult` that divides n_padded and is <= cap (never below mult)."""
    d = max(mult, (cap // mult) * mult)
    while d > mult:
        if n_padded % d == 0:
            return d
        d -= mult
    return mult


def _make_kernel(H, Np, tn, n_col):
    def kernel(xf_ref, a2_ref, b2_ref, w_ref, b_ref, o_ref, normed_ref):
        j = pl.program_id(1)

        # --- LayerNorm: once per row tile (first column step), cached in VMEM as bf16 ---
        @pl.when(j == 0)
        def _():
            if Np != H:
                x = xf_ref[:, :H].astype(jnp.float32)        # drop zero-padded lanes
            else:
                x = xf_ref[...].astype(jnp.float32)          # (tm, H)
            a2 = a2_ref[...].astype(jnp.float32)             # (1, H)
            b2 = b2_ref[...].astype(jnp.float32)             # (1, H)
            mean = jnp.mean(x, axis=-1, keepdims=True)
            centered = x - mean
            var_u = jnp.sum(centered * centered, axis=-1, keepdims=True) / (H - 1)  # torch.std: N-1
            inv = pl.reciprocal(jnp.sqrt(var_u) + _EPS, approx=True)                # EUP slot
            normed_ref[...] = ((centered * inv) * a2 + b2).astype(normed_ref.dtype)
            # TODO(synk): optional single-sweep sum / sum-of-squares LN to shrink the
            # per-row-tile prologue (minor vs the matmul column steps).

        # --- sublayer (Dense column tile): bf16 x bf16 -> f32 accumulate on the MXU ---
        y = jnp.dot(normed_ref[...], w_ref[...], preferred_element_type=jnp.float32)

        # --- residual slice taken from the already-resident full-width x block ---
        if n_col == 1:
            x_res = xf_ref[...]
        else:
            start = pl.multiple_of(j * tn, 128)              # tn % 128 == 0 in this path
            x_res = xf_ref[:, pl.ds(start, tn)]

        # --- dropout (eval: identity) + dense bias + residual, fused add chain ---
        o_ref[...] = (x_res.astype(jnp.float32) + y
                      + b_ref[...].astype(jnp.float32)).astype(o_ref.dtype)

    return kernel


def _run(x2, a2_, b2_, w_bf16, b_, rows, H, out_dtype, *,
         tm_req, tn_req, vmem_limit, w_resident_max_h, use_buffered):
    # ---- column tiling / padding ----
    if H <= max(w_resident_max_h, tn_req):
        Np, tn_eff, n_col = H, H, 1                          # W fully resident, read once
    else:
        Np = ((H + 127) // 128) * 128                        # lane-dense padded output width
        tn_eff = _largest_col_tile(Np, tn_req)
        n_col = Np // tn_eff

    x_p, w_p, b_p = x2, w_bf16, b_
    if Np != H:
        x_p = jnp.pad(x_p, ((0, 0), (0, Np - H)))
        w_p = jnp.pad(w_p, ((0, 0), (0, Np - H)))
        b_p = jnp.pad(b_p, ((0, 0), (0, Np - H)))

    # ---- row tile: largest multiple of 8 whose working set fits the VMEM budget ----
    xf_bufs = 1 if use_buffered else 2
    w_bufs = 1 if (use_buffered and n_col == 1) else 2

    def working_set(tm):
        return (xf_bufs * tm * Np * 4            # full-width x block (f32)
                + w_bufs * H * tn_eff * 2        # W column block (bf16)
                + 2 * tm * tn_eff * 4            # output block (f32, double-buffered)
                + tm * H * 2                     # cached normed(x) scratch (bf16)
                + 4 * H * 4 + 4 * tn_eff * 4)    # a_2 / b_2 / dense bias (tiny)

    budget = vmem_limit - 6 * 1024 * 1024        # headroom for compiler internal scratch
    tm_eff = max(8, (min(tm_req, ((rows + 7) // 8) * 8) // 8) * 8)
    while tm_eff > 8 and working_set(tm_eff) > budget:
        tm_eff = max(8, ((tm_eff // 2) // 8) * 8)

    rows_p = ((rows + tm_eff - 1) // tm_eff) * tm_eff
    if rows_p != rows:
        x_p = jnp.pad(x_p, ((0, rows_p - rows), (0, 0)))     # pad rows are sliced off later
    n_row = rows_p // tm_eff

    # ---- block specs ----
    xf_kwargs = {"pipeline_mode": pl.Buffered(1)} if use_buffered else {}
    w_kwargs = ({"pipeline_mode": pl.Buffered(1)}
                if (use_buffered and n_col == 1) else {})
    in_specs = [
        # full-width x tile: LayerNorm input + residual source; block index constant over j
        pl.BlockSpec((tm_eff, Np), lambda i, j: (i, 0), **xf_kwargs),
        pl.BlockSpec((1, H), lambda i, j: (0, 0)),                    # a_2
        pl.BlockSpec((1, H), lambda i, j: (0, 0)),                    # b_2
        pl.BlockSpec((H, tn_eff), lambda i, j: (0, j), **w_kwargs),   # W column block (bf16)
        pl.BlockSpec((1, tn_eff), lambda i, j: (0, j)),               # dense bias column block
    ]
    out_spec = pl.BlockSpec((tm_eff, tn_eff), lambda i, j: (i, j))

    # ---- cost estimate: count real W (re-)streaming traffic ----
    w_stream_bytes = (1 if n_col == 1 else n_row) * H * Np * 2
    cost = pl.CostEstimate(
        flops=2 * rows_p * H * Np + 8 * rows_p * H,
        transcendentals=2 * rows_p,                                   # sqrt + reciprocal / row
        bytes_accessed=(rows_p * Np * 4                               # x read (single pass)
                        + rows_p * Np * 4                             # out write
                        + w_stream_bytes
                        + 3 * H * 4 + Np * 4),
    )

    return pl.pallas_call(
        _make_kernel(H, Np, tn_eff, n_col),
        out_shape=jax.ShapeDtypeStruct((rows_p, Np), out_dtype),
        grid_spec=pltpu.PrefetchScalarGridSpec(
            num_scalar_prefetch=0,
            grid=(n_row, n_col),
            in_specs=in_specs,
            out_specs=out_spec,
            scratch_shapes=[pltpu.VMEM((tm_eff, H), jnp.bfloat16)],   # cached normed(x)
        ),
        compiler_params=pltpu.CompilerParams(
            dimension_semantics=("parallel", "arbitrary"),
            vmem_limit_bytes=vmem_limit,
        ),
        cost_estimate=cost,
    )(x_p, a2_, b2_, w_p, b_p)


def sublayer_connection(x, a2, b2, w, b, *, tm=None, tn=512):
    """out = x + dense(layernorm(x)); x: [B, S, H] -> [B, S, H]. Dropout in eval mode.

    Numerics: W and the cached normed(x) are fed to the MXU as bf16 with f32 accumulation
    and 1/(std+eps) uses the approximate EUP reciprocal, so results match an f32 reference
    to ~1e-2 relative; pass exact math upstream if tighter tolerance is required.
    """
    B, S, H = x.shape
    rows = B * S
    x2 = x.reshape(rows, H)

    # Generation-aware VMEM budget / default row tile.
    vmem_cap = _vmem_capacity_bytes()
    if vmem_cap >= 96 * 1024 * 1024:          # v5e / v6e: 128 MiB physical VMEM
        vmem_limit = 100 * 1024 * 1024
        tm_default = 1024
        w_resident_max_h = 4096
    else:                                      # v7x: 64 MiB per TensorCore -> leave headroom
        vmem_limit = 56 * 1024 * 1024
        tm_default = 512
        w_resident_max_h = 2048
    tm_req = tm if tm is not None else tm_default

    a2_ = a2.reshape(1, H).astype(jnp.float32)
    b2_ = b2.reshape(1, H).astype(jnp.float32)
    b_ = b.reshape(1, H).astype(jnp.float32)
    w_bf16 = w.astype(jnp.bfloat16)            # cast once in the wrapper, not per grid step

    run = functools.partial(
        _run, x2, a2_, b2_, w_bf16, b_, rows, H, x.dtype,
        tm_req=tm_req, tn_req=tn, vmem_limit=vmem_limit,
        w_resident_max_h=w_resident_max_h)

    prefer_buffered = hasattr(pl, "Buffered")
    try:
        out2 = run(use_buffered=prefer_buffered)
    except Exception:
        if not prefer_buffered:
            raise
        # Fallback: this JAX build rejects pipeline_mode=pl.Buffered(1); retile for
        # default double buffering instead.
        out2 = run(use_buffered=False)

    return out2[:rows, :H].reshape(B, S, H)


if __name__ == "__main__":
    B, S, H = 2, 8, 32
    key = jax.random.PRNGKey(0)
    kx, kw, kb = jax.random.split(key, 3)

    x = jax.random.normal(kx, (B, S, H), dtype=jnp.float32)

    # LayerNorm params as in nn.Parameter(torch.ones / torch.zeros)
    a2 = jnp.ones((H,), dtype=jnp.float32)
    b2 = jnp.zeros((H,), dtype=jnp.float32)
    # deterministic synthetic sublayer (dense) weights
    w = jax.random.normal(kw, (H, H), dtype=jnp.float32) * 0.05
    b = jax.random.normal(kb, (H,), dtype=jnp.float32) * 0.05

    out = sublayer_connection(x, a2, b2, w, b)
    jax.block_until_ready(out)

    # Plain-JAX reference (same torch.std semantics); tolerance loosened for the bf16 MXU
    # path + approximate reciprocal.
    mean = jnp.mean(x, axis=-1, keepdims=True)
    var_u = jnp.sum((x - mean) ** 2, axis=-1, keepdims=True) / (H - 1)
    normed = a2 * (x - mean) / (jnp.sqrt(var_u) + 1e-6) + b2
    ref = x + (normed @ w + b)
    assert out.shape == ref.shape, "shape mismatch vs reference"
    assert jnp.allclose(out, ref, atol=3e-2, rtol=3e-2), "mismatch vs reference"

    print("KERNEL_OK")
</pallas_src>

<mosaic_0001>
module attributes {stable_mosaic.version = 11 : i64} {
  func.func @kernel(%arg0: i32, %arg1: i32, %arg2: memref<16x32xf32, #tpu.memory_space<vmem>>, %arg3: memref<1x32xf32, #tpu.memory_space<vmem>>, %arg4: memref<1x32xf32, #tpu.memory_space<vmem>>, %arg5: memref<32x32xbf16, #tpu.memory_space<vmem>>, %arg6: memref<1x32xf32, #tpu.memory_space<vmem>>, %arg7: memref<16x32xf32, #tpu.memory_space<vmem>>, %arg8: memref<16x32xbf16, #tpu.memory_space<vmem>>) attributes {dimension_semantics = [#tpu.dimension_semantics<parallel>, #tpu.dimension_semantics<arbitrary>], iteration_bounds = array<i64: 1, 1>, scalar_prefetch = 0 : i64, scratch_operands = 1 : i64, tpu.core_type = #tpu.core_type<tc>, window_params = [{pipeline_mode = #tpu.pipeline_mode<synchronous>, transform_indices = @transform_0, window_bounds = array<i64: 16, 32>}, {pipeline_mode = #tpu.pipeline_mode<synchronous>, transform_indices = @transform_1, window_bounds = array<i64: 1, 32>}, {pipeline_mode = #tpu.pipeline_mode<synchronous>, transform_indices = @transform_2, window_bounds = array<i64: 1, 32>}, {pipeline_mode = #tpu.pipeline_mode<synchronous>, transform_indices = @transform_3, window_bounds = array<i64: 32, 32>}, {transform_indices = @transform_4, window_bounds = array<i64: 1, 32>}, {transform_indices = @transform_5, window_bounds = array<i64: 16, 32>}]} {
    %c0_i32 = arith.constant 0 : i32
    %0 = arith.cmpi eq, %arg1, %c0_i32 : i32
    %1 = arith.extui %0 : i1 to i32
    %c0_i32_0 = arith.constant 0 : i32
    %2 = arith.cmpi ne, %1, %c0_i32_0 : i32
    scf.if %2 {
      %c0_10 = arith.constant 0 : index
      %c0_11 = arith.constant 0 : index
      %12 = vector.load %arg2[%c0_10, %c0_11] : memref<16x32xf32, #tpu.memory_space<vmem>>, vector<16x32xf32>
      %c0_12 = arith.constant 0 : index
      %c0_13 = arith.constant 0 : index
      %13 = vector.load %arg3[%c0_12, %c0_13] : memref<1x32xf32, #tpu.memory_space<vmem>>, vector<1x32xf32>
      %c0_14 = arith.constant 0 : index
      %c0_15 = arith.constant 0 : index
      %14 = vector.load %arg4[%c0_14, %c0_15] : memref<1x32xf32, #tpu.memory_space<vmem>>, vector<1x32xf32>
      %cst_16 = arith.constant dense<0.000000e+00> : vector<16xf32>
      %15 = vector.multi_reduction <add>, %12, %cst_16 [1] : vector<16x32xf32> to vector<16xf32>
      %16 = vector.shape_cast %15 : vector<16xf32> to vector<16x1xf32>
      %cst_17 = arith.constant 3.200000e+01 : f32
      %17 = vector.broadcast %cst_17 : f32 to vector<16x1xf32>
      %18 = arith.divf %16, %17 : vector<16x1xf32>
      %19 = vector.broadcast %18 : vector<16x1xf32> to vector<16x32xf32>
      %20 = arith.subf %12, %19 : vector<16x32xf32>
      %21 = arith.mulf %20, %20 : vector<16x32xf32>
      %cst_18 = arith.constant dense<0.000000e+00> : vector<16xf32>
      %22 = vector.multi_reduction <add>, %21, %cst_18 [1] : vector<16x32xf32> to vector<16xf32>
      %23 = vector.shape_cast %22 : vector<16xf32> to vector<16x1xf32>
      %cst_19 = arith.constant 3.100000e+01 : f32
      %24 = vector.broadcast %cst_19 : f32 to vector<16x1xf32>
      %25 = arith.divf %23, %24 : vector<16x1xf32>
      %26 = math.sqrt %25 : vector<16x1xf32>
      %cst_20 = arith.constant 9.99999997E-7 : f32
      %27 = vector.broadcast %cst_20 : f32 to vector<16x1xf32>
      %28 = arith.addf %26, %27 : vector<16x1xf32>
      %29 = tpu.reciprocal %28 {approx = true} : vector<16x1xf32> -> vector<16x1xf32>
      %30 = vector.broadcast %29 : vector<16x1xf32> to vector<16x32xf32>
      %31 = arith.mulf %20, %30 : vector<16x32xf32>
      %32 = vector.broadcast %13 : vector<1x32xf32> to vector<16x32xf32>
      %33 = arith.mulf %31, %32 : vector<16x32xf32>
      %34 = vector.broadcast %14 : vector<1x32xf32> to vector<16x32xf32>
      %35 = arith.addf %33, %34 : vector<16x32xf32>
      %36 = arith.truncf %35 : vector<16x32xf32> to vector<16x32xbf16>
      %c0_21 = arith.constant 0 : index
      %c0_22 = arith.constant 0 : index
      %37 = vector.load %arg8[%c0_21, %c0_22] : memref<16x32xbf16, #tpu.memory_space<vmem>>, vector<16x32xbf16>
      tpu.vector_store %arg8[%c0_21, %c0_22], %36 {strides = array<i32>} : memref<16x32xbf16, #tpu.memory_space<vmem>>, vector<16x32xbf16>,
    } else {
    }
    %c0 = arith.constant 0 : index
    %c0_1 = arith.constant 0 : index
    %3 = vector.load %arg8[%c0, %c0_1] : memref<16x32xbf16, #tpu.memory_space<vmem>>, vector<16x32xbf16>
    %c0_2 = arith.constant 0 : index
    %c0_3 = arith.constant 0 : index
    %4 = vector.load %arg5[%c0_2, %c0_3] : memref<32x32xbf16, #tpu.memory_space<vmem>>, vector<32x32xbf16>
    %cst = arith.constant dense<0.000000e+00> : vector<16x32xf32>
    %5 = tpu.matmul %3, %4, %cst {dimension_numbers = #tpu.dot_dimension_numbers<[1], [0], [0], [1], [0, 0, 1, 1], [], []>} : vector<16x32xbf16>, vector<32x32xbf16>, vector<16x32xf32> -> vector<16x32xf32>
    %c0_4 = arith.constant 0 : index
    %c0_5 = arith.constant 0 : index
    %6 = vector.load %arg2[%c0_4, %c0_5] : memref<16x32xf32, #tpu.memory_space<vmem>>, vector<16x32xf32>
    %7 = arith.addf %6, %5 : vector<16x32xf32>
    %c0_6 = arith.constant 0 : index
    %c0_7 = arith.constant 0 : index
    %8 = vector.load %arg6[%c0_6, %c0_7] : memref<1x32xf32, #tpu.memory_space<vmem>>, vector<1x32xf32>
    %9 = vector.broadcast %8 : vector<1x32xf32> to vector<16x32xf32>
    %10 = arith.addf %7, %9 : vector<16x32xf32>
    %c0_8 = arith.constant 0 : index
    %c0_9 = arith.constant 0 : index
    %11 = vector.load %arg7[%c0_8, %c0_9] : memref<16x32xf32, #tpu.memory_space<vmem>>, vector<16x32xf32>
    tpu.vector_store %arg7[%c0_8, %c0_9], %10 {strides = array<i32>} : memref<16x32xf32, #tpu.memory_space<vmem>>, vector<16x32xf32>,
    return
  }
  func.func @transform_0(%arg0: i32, %arg1: i32) -> (i32, i32) {
    %c0_i32 = arith.constant 0 : i32
    %c0_i32_0 = arith.constant 0 : i32
    return %arg0, %c0_i32 : i32, i32
  }
  func.func @transform_1(%arg0: i32, %arg1: i32) -> (i32, i32) {
    %c0_i32 = arith.constant 0 : i32
    %c0_i32_0 = arith.constant 0 : i32
    %c0_i32_1 = arith.constant 0 : i32
    return %c0_i32, %c0_i32_0 : i32, i32
  }
  func.func @transform_2(%arg0: i32, %arg1: i32) -> (i32, i32) {
    %c0_i32 = arith.constant 0 : i32
    %c0_i32_0 = arith.constant 0 : i32
    %c0_i32_1 = arith.constant 0 : i32
    return %c0_i32, %c0_i32_0 : i32, i32
  }
  func.func @transform_3(%arg0: i32, %arg1: i32) -> (i32, i32) {
    %c0_i32 = arith.constant 0 : i32
    %c0_i32_0 = arith.constant 0 : i32
    return %c0_i32, %arg1 : i32, i32
  }
  func.func @transform_4(%arg0: i32, %arg1: i32) -> (i32, i32) {
    %c0_i32 = arith.constant 0 : i32
    %c0_i32_0 = arith.constant 0 : i32
    return %c0_i32, %arg1 : i32, i32
  }
  func.func @transform_5(%arg0: i32, %arg1: i32) -> (i32, i32) {
    %c0_i32 = arith.constant 0 : i32
    return %arg0, %arg1 : i32, i32
  }
}

module attributes {stable_mosaic.version = 11 : i64} {
  func.func @kernel(%arg0: i32, %arg1: i32, %arg2: memref<16x32xf32, #tpu.memory_space<vmem>>, %arg3: memref<1x32xf32, #tpu.memory_space<vmem>>, %arg4: memref<1x32xf32, #tpu.memory_space<vmem>>, %arg5: memref<32x32xbf16, #tpu.memory_space<vmem>>, %arg6: memref<1x32xf32, #tpu.memory_space<vmem>>, %arg7: memref<16x32xf32, #tpu.memory_space<vmem>>, %arg8: memref<16x32xbf16, #tpu.memory_space<vmem>>) attributes {dimension_semantics = [#tpu.dimension_semantics<parallel>, #tpu.dimension_semantics<arbitrary>], iteration_bounds = array<i64: 1, 1>, scalar_prefetch = 0 : i64, scratch_operands = 1 : i64, tpu.core_type = #tpu.core_type<tc>, window_params = [{transform_indices = @transform_0, window_bounds = array<i64: 16, 32>}, {pipeline_mode = #tpu.pipeline_mode<synchronous>, transform_indices = @transform_1, window_bounds = array<i64: 1, 32>}, {pipeline_mode = #tpu.pipeline_mode<synchronous>, transform_indices = @transform_2, window_bounds = array<i64: 1, 32>}, {transform_indices = @transform_3, window_bounds = array<i64: 32, 32>}, {transform_indices = @transform_4, window_bounds = array<i64: 1, 32>}, {transform_indices = @transform_5, window_bounds = array<i64: 16, 32>}]} {
    %c0_i32 = arith.constant 0 : i32
    %0 = arith.cmpi eq, %arg1, %c0_i32 : i32
    %1 = arith.extui %0 : i1 to i32
    %c0_i32_0 = arith.constant 0 : i32
    %2 = arith.cmpi ne, %1, %c0_i32_0 : i32
    scf.if %2 {
      %c0_10 = arith.constant 0 : index
      %c0_11 = arith.constant 0 : index
      %12 = vector.load %arg2[%c0_10, %c0_11] : memref<16x32xf32, #tpu.memory_space<vmem>>, vector<16x32xf32>
      %c0_12 = arith.constant 0 : index
      %c0_13 = arith.constant 0 : index
      %13 = vector.load %arg3[%c0_12, %c0_13] : memref<1x32xf32, #tpu.memory_space<vmem>>, vector<1x32xf32>
      %c0_14 = arith.constant 0 : index
      %c0_15 = arith.constant 0 : index
      %14 = vector.load %arg4[%c0_14, %c0_15] : memref<1x32xf32, #tpu.memory_space<vmem>>, vector<1x32xf32>
      %cst_16 = arith.constant dense<0.000000e+00> : vector<16xf32>
      %15 = vector.multi_reduction <add>, %12, %cst_16 [1] : vector<16x32xf32> to vector<16xf32>
      %16 = vector.shape_cast %15 : vector<16xf32> to vector<16x1xf32>
      %cst_17 = arith.constant 3.200000e+01 : f32
      %17 = vector.broadcast %cst_17 : f32 to vector<16x1xf32>
      %18 = arith.divf %16, %17 : vector<16x1xf32>
      %19 = vector.broadcast %18 : vector<16x1xf32> to vector<16x32xf32>
      %20 = arith.subf %12, %19 : vector<16x32xf32>
      %21 = arith.mulf %20, %20 : vector<16x32xf32>
      %cst_18 = arith.constant dense<0.000000e+00> : vector<16xf32>
      %22 = vector.multi_reduction <add>, %21, %cst_18 [1] : vector<16x32xf32> to vector<16xf32>
      %23 = vector.shape_cast %22 : vector<16xf32> to vector<16x1xf32>
      %cst_19 = arith.constant 3.100000e+01 : f32
      %24 = vector.broadcast %cst_19 : f32 to vector<16x1xf32>
      %25 = arith.divf %23, %24 : vector<16x1xf32>
      %26 = math.sqrt %25 : vector<16x1xf32>
      %cst_20 = arith.constant 9.99999997E-7 : f32
      %27 = vector.broadcast %cst_20 : f32 to vector<16x1xf32>
      %28 = arith.addf %26, %27 : vector<16x1xf32>
      %29 = tpu.reciprocal %28 {approx = true} : vector<16x1xf32> -> vector<16x1xf32>
      %30 = vector.broadcast %29 : vector<16x1xf32> to vector<16x32xf32>
      %31 = arith.mulf %20, %30 : vector<16x32xf32>
      %32 = vector.broadcast %13 : vector<1x32xf32> to vector<16x32xf32>
      %33 = arith.mulf %31, %32 : vector<16x32xf32>
      %34 = vector.broadcast %14 : vector<1x32xf32> to vector<16x32xf32>
      %35 = arith.addf %33, %34 : vector<16x32xf32>
      %36 = arith.truncf %35 : vector<16x32xf32> to vector<16x32xbf16>
      %c0_21 = arith.constant 0 : index
      %c0_22 = arith.constant 0 : index
      %37 = vector.load %arg8[%c0_21, %c0_22] : memref<16x32xbf16, #tpu.memory_space<vmem>>, vector<16x32xbf16>
      tpu.vector_store %arg8[%c0_21, %c0_22], %36 {strides = array<i32>} : memref<16x32xbf16, #tpu.memory_space<vmem>>, vector<16x32xbf16>,
    } else {
    }
    %c0 = arith.constant 0 : index
    %c0_1 = arith.constant 0 : index
    %3 = vector.load %arg8[%c0, %c0_1] : memref<16x32xbf16, #tpu.memory_space<vmem>>, vector<16x32xbf16>
    %c0_2 = arith.constant 0 : index
    %c0_3 = arith.constant 0 : index
    %4 = vector.load %arg5[%c0_2, %c0_3] : memref<32x32xbf16, #tpu.memory_space<vmem>>, vector<32x32xbf16>
    %cst = arith.constant dense<0.000000e+00> : vector<16x32xf32>
    %5 = tpu.matmul %3, %4, %cst {dimension_numbers = #tpu.dot_dimension_numbers<[1], [0], [0], [1], [0, 0, 1, 1], [], []>} : vector<16x32xbf16>, vector<32x32xbf16>, vector<16x32xf32> -> vector<16x32xf32>
    %c0_4 = arith.constant 0 : index
    %c0_5 = arith.constant 0 : index
    %6 = vector.load %arg2[%c0_4, %c0_5] : memref<16x32xf32, #tpu.memory_space<vmem>>, vector<16x32xf32>
    %7 = arith.addf %6, %5 : vector<16x32xf32>
    %c0_6 = arith.constant 0 : index
    %c0_7 = arith.constant 0 : index
    %8 = vector.load %arg6[%c0_6, %c0_7] : memref<1x32xf32, #tpu.memory_space<vmem>>, vector<1x32xf32>
    %9 = vector.broadcast %8 : vector<1x32xf32> to vector<16x32xf32>
    %10 = arith.addf %7, %9 : vector<16x32xf32>
    %c0_8 = arith.constant 0 : index
    %c0_9 = arith.constant 0 : index
    %11 = vector.load %arg7[%c0_8, %c0_9] : memref<16x32xf32, #tpu.memory_space<vmem>>, vector<16x32xf32>
    tpu.vector_store %arg7[%c0_8, %c0_9], %10 {strides = array<i32>} : memref<16x32xf32, #tpu.memory_space<vmem>>, vector<16x32xf32>,
    return
  }
  func.func @transform_0(%arg0: i32, %arg1: i32) -> (i32, i32) {
    %c0_i32 = arith.constant 0 : i32
    %c0_i32_0 = arith.constant 0 : i32
    return %arg0, %c0_i32 : i32, i32
  }
  func.func @transform_1(%arg0: i32, %arg1: i32) -> (i32, i32) {
    %c0_i32 = arith.constant 0 : i32
    %c0_i32_0 = arith.constant 0 : i32
    %c0_i32_1 = arith.constant 0 : i32
    return %c0_i32, %c0_i32_0 : i32, i32
  }
  func.func @transform_2(%arg0: i32, %arg1: i32) -> (i32, i32) {
    %c0_i32 = arith.constant 0 : i32
    %c0_i32_0 = arith.constant 0 : i32
    %c0_i32_1 = arith.constant 0 : i32
    return %c0_i32, %c0_i32_0 : i32, i32
  }
  func.func @transform_3(%arg0: i32, %arg1: i32) -> (i32, i32) {
    %c0_i32 = arith.constant 0 : i32
    %c0_i32_0 = arith.constant 0 : i32
    return %c0_i32, %arg1 : i32, i32
  }
  func.func @transform_4(%arg0: i32, %arg1: i32) -> (i32, i32) {
    %c0_i32 = arith.constant 0 : i32
    %c0_i32_0 = arith.constant 0 : i32
    return %c0_i32, %arg1 : i32, i32
  }
  func.func @transform_5(%arg0: i32, %arg1: i32) -> (i32, i32) {
    %c0_i32 = arith.constant 0 : i32
    return %arg0, %arg1 : i32, i32
  }
}

</mosaic_0001>

<llo_original>
// kernel: tpu_custom_call.1
$region0: #{tpu_custom_call.1}
  #allocation0 [shape = 'u32[]', space=smem, size = 0x4, offset = 0x4, fixed_abs, tag = 'smem constant byte address 0x4 - core index']
  #allocation1 [shape = 'u32[72,128]{1,0:T(1,128)}', space=vmem, size = 0x9000, scoped, tag = 'internal scratch']
  #allocation2 [shape = 'bf16[16,32]{1,0:T(8,128)(2,1)}', space=vmem, size = 0x1000, scoped, tag = 'scratch operand']
  %s0 = inlined_call_operand.hbm [shape: f32[16,32], index: 0, kind: input, shape index: {}]
  %s1 = inlined_call_operand.hbm [shape: f32[1,32], index: 1, kind: input, shape index: {}]
  %s2 = inlined_call_operand.vmem [shape: f32[1,32], index: 2, kind: input, shape index: {}]
  %s3 = inlined_call_operand.hbm [shape: bf16[32,32], index: 3, kind: input, shape index: {}]
  %s4 = inlined_call_operand.vmem [shape: f32[1,32], index: 4, kind: input, shape index: {}]
  %s5 = inlined_call_operand.hbm [shape: f32[16,32], index: 5, kind: output, shape index: {}]
  %s6 = sld [smem:[#allocation0]]
  $region46: #{tpu_custom_call.1} parent=0
    _
  %s8 = ssub.s32 1, %s6
  %s9 = scalar_select 0, %s8, %s6
  $region1: #{tpu_custom_call.1} parent=0
    #allocation3 [shape = 'u8[8192]{0}', space=vmem, size = 0x2000, scoped, tag = 'input window, operand 0, single buffered']
    #allocation4 [shape = 's32[1]{0}', space=sflag, size = 0x4, scoped, tag = 'scoped memory for tpu_custom_call.1']
    #allocation5 [shape = 's32[1]{0}', space=sflag, size = 0x4, scoped, tag = 'scoped memory for tpu_custom_call.1']
    #allocation6 [shape = 'u8[512]{0}', space=vmem, size = 0x400, scoped, tag = 'input window, operand 1, single buffered']
    #allocation7 [shape = 's32[1]{0}', space=sflag, size = 0x4, scoped, tag = 'scoped memory for tpu_custom_call.1']
    #allocation8 [shape = 'u8[8192]{0}', space=vmem, size = 0x2000, scoped, tag = 'input window, operand 3, single buffered']
    #allocation9 [shape = 'u8[8192]{0}', space=vmem, size = 0x2000, scoped, tag = 'output window, operand 0, single buffered']
    %10 = vsyncpa [#allocation4], 0
    %11 = vsyncpa [#allocation7], 0
    %12 = vsyncpa [#allocation5], 0
    // Predicated region
    $region2: #{tpu_custom_call.1} parent=1 // pred_check
      _
    $region3: #{tpu_custom_call.1} parent=1 // pred_check_branch
      %14 = sbr.rel (0) target = $region5
    $region4: #{tpu_custom_call.1} parent=1 // pred_region
      %16 = vsyncadd [#allocation4], 0
      %s17 = sshll.u32 %s0, 4
      %s18 = int_to_ptr.hbm [resolvable:$true] %s17
      %s19 = sshll.u32 [#allocation3], 4
      %s20 = int_to_ptr.vmem [resolvable:$true] %s19
      %25 = dma.hbm_to_vmem [thread:$0]  %s18, 256, %s20, [#allocation4], 128, 128, 8
    $region5: #{tpu_custom_call.1} parent=1 // pred_fallthru
      _
    // Predicated region
    $region6: #{tpu_custom_call.1} parent=1 // pred_check
      _
    $region7: #{tpu_custom_call.1} parent=1 // pred_check_branch
      %27 = sbr.rel (0) target = $region9
    $region8: #{tpu_custom_call.1} parent=1 // pred_region
      %29 = vsyncadd [#allocation7], 0
      %s31 = sshll.u32 %s1, 4
      %s32 = int_to_ptr.hbm [resolvable:$true] %s31
      %s33 = sshll.u32 [#allocation6], 4
      %s34 = int_to_ptr.vmem [resolvable:$true] %s33
      %36 = dma.hbm_to_vmem [thread:$0]  %s32, 16, %s34, [#allocation7]
    $region9: #{tpu_custom_call.1} parent=1 // pred_fallthru
      _
    // Predicated region
    $region10: #{tpu_custom_call.1} parent=1 // pred_check
      _
    $region11: #{tpu_custom_call.1} parent=1 // pred_check_branch
      %38 = sbr.rel (0) target = $region13
    $region12: #{tpu_custom_call.1} parent=1 // pred_region
      _
    $region13: #{tpu_custom_call.1} parent=1 // pred_fallthru
      _
    // Predicated region
    $region14: #{tpu_custom_call.1} parent=1 // pred_check
      _
    $region15: #{tpu_custom_call.1} parent=1 // pred_check_branch
      %40 = sbr.rel (0) target = $region17
    $region16: #{tpu_custom_call.1} parent=1 // pred_region
      %42 = vsyncadd [#allocation7], 0
      %s43 = sshll.u32 %s3, 4
      %s44 = int_to_ptr.hbm [resolvable:$true] %s43
      %s45 = sshll.u32 [#allocation8], 4
      %s46 = int_to_ptr.vmem [resolvable:$true] %s45
      %51 = dma.hbm_to_vmem [thread:$0]  %s44, 256, %s46, [#allocation7], 64, 64, 4
    $region17: #{tpu_custom_call.1} parent=1 // pred_fallthru
      _
    // Predicated region
    $region18: #{tpu_custom_call.1} parent=1 // pred_check
      _
    $region19: #{tpu_custom_call.1} parent=1 // pred_check_branch
      %53 = sbr.rel (0) target = $region21
    $region20: #{tpu_custom_call.1} parent=1 // pred_region
      _
    $region21: #{tpu_custom_call.1} parent=1 // pred_fallthru
      _
    // Predicated region
    $region22: #{tpu_custom_call.1} parent=1 // pred_check
      _
    $region23: #{tpu_custom_call.1} parent=1 // pred_check_branch
      %55 = sbr.rel (0) target = $region25
    $region24: #{tpu_custom_call.1} parent=1 // pred_region
      %57 = dma.done [#allocation4], 256
    $region25: #{tpu_custom_call.1} parent=1 // pred_fallthru
      _
    // Predicated region
    $region26: #{tpu_custom_call.1} parent=1 // pred_check
      _
    $region27: #{tpu_custom_call.1} parent=1 // pred_check_branch
      %59 = sbr.rel (0) target = $region29
    $region28: #{tpu_custom_call.1} parent=1 // pred_region
      %61 = dma.done [#allocation7], 16
    $region29: #{tpu_custom_call.1} parent=1 // pred_fallthru
      _
    // Predicated region
    $region30: #{tpu_custom_call.1} parent=1 // pred_check
      _
    $region31: #{tpu_custom_call.1} parent=1 // pred_check_branch
      %63 = sbr.rel (0) target = $region33
    $region32: #{tpu_custom_call.1} parent=1 // pred_region
      %65 = dma.done [#allocation7], 256
    $region33: #{tpu_custom_call.1} parent=1 // pred_fallthru
      _
    %p67 = scmp.eq.s32.totalorder 0, 0
    // Predicated region
    $region34: #{tpu_custom_call.1} parent=1 // pred_check
      %p68 = pneg %p67
    $region35: #{tpu_custom_call.1} parent=1 // pred_check_branch
      %70 = sbr.rel (%p68) target = $region37
    $region36: #{tpu_custom_call.1} parent=1 // pred_region
      %v71 = vld [vmem:[#allocation3] sm:$0xff]
      %v72 = vld [vmem:[#allocation3 + $0x8] sm:$0xff]
      %v73 = vld [vmem:[#allocation6] sm:$0x1]
      %v74 = vld [vmem:[%s2] sm:$0x1]
      %vm75 = vcmask 261120
      %v76 = vsel %vm75, %v71, 0.0
      %77 = vadd.xlane.f32.xlu0 %v76
      %v78 = vpop.xlane.xlu0 %77
      %v79 = vsel %vm75, %v72, 0.0
      %80 = vadd.xlane.f32.xlu0 %v79
      %v81 = vpop.xlane.xlu0 %80
      %v82 = vrcp.pop 32.0
      %v83 = vmul.f32 32.0, %v82
      %v84 = vsub.f32 1.0, %v83
      %v85 = vmul.f32 %v82, %v84
      %v86 = vadd.f32 %v82, %v85
      %vm87 = vweird.f32 %v82
      %v88 = vsel %vm87, %v82, %v86
      %v89 = vmul.f32 %v78, %v88
      %v90 = vmul.f32 %v81, %v88
      %v91 = vsub.f32 %v71, %v89
      %v92 = vsub.f32 %v72, %v90
      %v93 = vmul.f32 %v91, %v91
      %v94 = vmul.f32 %v92, %v92
      %v95 = vsel %vm75, %v93, 0.0
      %96 = vadd.xlane.f32.xlu0 %v95
      %v97 = vpop.xlane.xlu0 %96
      %v98 = vsel %vm75, %v94, 0.0
      %99 = vadd.xlane.f32.xlu0 %v98
      %v100 = vpop.xlane.xlu0 %99
      %v101 = vrcp.pop 31.0
      %v102 = vmul.f32 31.0, %v101
      %v103 = vsub.f32 1.0, %v102
      %v104 = vmul.f32 %v101, %v103
      %v105 = vadd.f32 %v101, %v104
      %vm106 = vweird.f32 %v101
      %v107 = vsel %vm106, %v101, %v105
      %v108 = vmul.f32 %v97, %v107
      %v109 = vmul.f32 %v100, %v107
      %v110 = vrsqrt.pop %v108
      %v111 = vmul.f32 %v110, %v108
      %v112 = vmul.f32 %v111, %v110
      %v113 = vmul.f32 0.5, %v112
      %v114 = vsub.f32 1.5, %v113
      %v115 = vmul.f32 %v110, %v114
      %v116 = vmul.f32 %v108, %v115
      %vm117 = vcmp.eq.f32.partialorder %v108, inf
      %v118 = vsel %vm117, %v108, %v116
      %vm119 = vcmp.eq.f32.partialorder %v108, 0.0
      %v120 = vand.u32 %v108, 2147483648
      %v121 = vsel %vm119, %v120, %v118
      %v122 = vrsqrt.pop %v109
      %v123 = vmul.f32 %v122, %v109
      %v124 = vmul.f32 %v123, %v122
      %v125 = vmul.f32 0.5, %v124
      %v126 = vsub.f32 1.5, %v125
      %v127 = vmul.f32 %v122, %v126
      %v128 = vmul.f32 %v109, %v127
      %vm129 = vcmp.eq.f32.partialorder %v109, inf
      %v130 = vsel %vm129, %v109, %v128
      %vm131 = vcmp.eq.f32.partialorder %v109, 0.0
      %v132 = vand.u32 %v109, 2147483648
      %v133 = vsel %vm131, %v132, %v130
      %v134 = vadd.f32 %v121, 1e-06
      %v135 = vadd.f32 %v133, 1e-06
      %v136 = vrcp.pop %v134
      %v137 = vrcp.pop %v135
      %v138 = vmul.f32 %v91, %v136
      %v139 = vmul.f32 %v92, %v137
      %v141 = vperm.slane %v73, 0
      %v143 = vmul.f32 %v138, %v141
      %v144 = vmul.f32 %v139, %v141
      %v146 = vperm.slane %v74, 0
      %v148 = vadd.f32 %v143, %v146
      %v149 = vadd.f32 %v144, %v146
      %v150 = vpack.c.bf16 %v148, %v148
      %v151 = vpack.c.bf16 %v149, %v149
      %vm152 = vcmask 257024
      %153 = vst.msk [vmem:[#allocation2] sm:$0xf] %vm152, %v150
      %154 = vst.msk [vmem:[#allocation2 + $0x4] sm:$0xf] %vm152, %v151
    $region37: #{tpu_custom_call.1} parent=1 // pred_fallthru
      _
    %v155 = vld [vmem:[#allocation2] sm:$0xf]
    %v156 = vld [vmem:[#allocation2 + $0x4] sm:$0xf]
    %v157 = vld [vmem:[#allocation8] sm:$0xf]
    %v158 = vld [vmem:[#allocation8 + $0x4] sm:$0xf]
    %v159 = vld [vmem:[#allocation8 + $0x8] sm:$0xf]
    %v160 = vld [vmem:[#allocation8 + $0xc] sm:$0xf]
    %v163 = vunpack.c.l.b16 %v155
    %v164 = vunpack.c.l.b16 %v156
    %v165 = vpack.c.b16 %v164, %v163
    %v170 = vunpack.c.l.b16 %v157
    %v171 = vunpack.c.l.b16 %v158
    %v172 = vunpack.c.l.b16 %v159
    %v173 = vunpack.c.l.b16 %v160
    %v174 = vpack.c.b16 %v171, %v170
    %v175 = vpack.c.b16 %v173, %v172
    %vm178 = vcmask 261120
    %v180 = vsel %vm178, %v165, 0
    %182 = vmatpush.bf16.msra.mxu0 0
    %183 = vmatpush.bf16.msra.mxu0 0
    %184 = vmatpush.bf16.msra.mxu0 0
    %185 = vmatpush.bf16.msra.mxu0 0
    %186 = vmatpush.bf16.msra.mxu0 0
    %187 = vmatpush.bf16.msra.mxu0 0
    %188 = vmatpush.bf16.msra.mxu0 %v175
    %189 = vmatpush.bf16.msra.mxu0 %v174
    %190 = vmatmul.bf16.gmra.mxu0 %v180
    %v191 = vpop.f32.mrf.mxu0
    %v192 = vadd.f32 0.0, %v191
    %v193 = vpop.f32.mrf.mxu0
    %v194 = vadd.f32 0.0, %v193
    %195 = vdwg.mxu0
    %v196 = vld [vmem:[#allocation3] sm:$0xff]
    %v197 = vld [vmem:[#allocation3 + $0x8] sm:$0xff]
    %v198 = vadd.f32 %v196, %v192
    %v199 = vadd.f32 %v197, %v194
    %v200 = vld [vmem:[%s4] sm:$0x1]
    %v202 = vperm.slane %v200, 0
    %v204 = vadd.f32 %v198, %v202
    %v205 = vadd.f32 %v199, %v202
    %206 = vst.msk [vmem:[#allocation9] sm:$0xff] %vm178, %v204
    %207 = vst.msk [vmem:[#allocation9 + $0x8] sm:$0xff] %vm178, %v205
    // Predicated region
    $region38: #{tpu_custom_call.1} parent=1 // pred_check
      _
    $region39: #{tpu_custom_call.1} parent=1 // pred_check_branch
      %209 = sbr.rel (0) target = $region41
    $region40: #{tpu_custom_call.1} parent=1 // pred_region
      %211 = vsyncadd [#allocation5], 0
      %s212 = sshll.u32 [#allocation9], 4
      %s213 = int_to_ptr.vmem [resolvable:$true] %s212
      %s214 = sshll.u32 %s5, 4
      %s215 = int_to_ptr.hbm [resolvable:$true] %s214
      %220 = dma.vmem_to_hbm [thread:$0]  %s213, 256, %s215, [#allocation5], 128, 128, 8
    $region41: #{tpu_custom_call.1} parent=1 // pred_fallthru
      _
    // Predicated region
    $region42: #{tpu_custom_call.1} parent=1 // pred_check
      _
    $region43: #{tpu_custom_call.1} parent=1 // pred_check_branch
      %222 = sbr.rel (0) target = $region45
    $region44: #{tpu_custom_call.1} parent=1 // pred_region
      %224 = dma.done [#allocation5], 256
    $region45: #{tpu_custom_call.1} parent=1 // pred_fallthru
      _
    %225 = vsyncpa [#allocation4], 1
    %226 = vsyncpa [#allocation7], 1
    %227 = vsyncpa [#allocation5], 1

// kernel: tpu_custom_call.1
$region0: #{tpu_custom_call.1}
  #allocation0 [shape = 'u32[]', space=smem, size = 0x4, offset = 0x4, fixed_abs, tag = 'smem constant byte address 0x4 - core index']
  #allocation1 [shape = 'u32[72,128]{1,0:T(1,128)}', space=vmem, size = 0x9000, scoped, tag = 'internal scratch']
  #allocation2 [shape = 'bf16[16,32]{1,0:T(8,128)(2,1)}', space=vmem, size = 0x1000, scoped, tag = 'scratch operand']
  %s0 = inlined_call_operand.hbm [shape: f32[16,32], index: 0, kind: input, shape index: {}]
  %s1 = inlined_call_operand.hbm [shape: f32[1,32], index: 1, kind: input, shape index: {}]
  %s2 = inlined_call_operand.vmem [shape: f32[1,32], index: 2, kind: input, shape index: {}]
  %s3 = inlined_call_operand.hbm [shape: bf16[32,32], index: 3, kind: input, shape index: {}]
  %s4 = inlined_call_operand.vmem [shape: f32[1,32], index: 4, kind: input, shape index: {}]
  %s5 = inlined_call_operand.hbm [shape: f32[16,32], index: 5, kind: output, shape index: {}]
  %s6 = sld [smem:[#allocation0]]
  $region46: #{tpu_custom_call.1} parent=0
    _
  %s8 = ssub.s32 1, %s6
  %s9 = scalar_select 0, %s8, %s6
  $region1: #{tpu_custom_call.1} parent=0
    #allocation3 [shape = 'u8[8192]{0}', space=vmem, size = 0x2000, scoped, tag = 'input window, operand 0, single buffered']
    #allocation4 [shape = 's32[1]{0}', space=sflag, size = 0x4, scoped, tag = 'scoped memory for tpu_custom_call.1']
    #allocation5 [shape = 's32[1]{0}', space=sflag, size = 0x4, scoped, tag = 'scoped memory for tpu_custom_call.1']
    #allocation6 [shape = 'u8[512]{0}', space=vmem, size = 0x400, scoped, tag = 'input window, operand 1, single buffered']
    #allocation7 [shape = 's32[1]{0}', space=sflag, size = 0x4, scoped, tag = 'scoped memory for tpu_custom_call.1']
    #allocation8 [shape = 'u8[8192]{0}', space=vmem, size = 0x2000, scoped, tag = 'input window, operand 3, single buffered']
    #allocation9 [shape = 'u8[8192]{0}', space=vmem, size = 0x2000, scoped, tag = 'output window, operand 0, single buffered']
    %10 = vsyncpa [#allocation4], 0
    %11 = vsyncpa [#allocation7], 0
    %12 = vsyncpa [#allocation5], 0
    // Predicated region
    $region2: #{tpu_custom_call.1} parent=1 // pred_check
      _
    $region3: #{tpu_custom_call.1} parent=1 // pred_check_branch
      %14 = sbr.rel (0) target = $region5
    $region4: #{tpu_custom_call.1} parent=1 // pred_region
      %16 = vsyncadd [#allocation4], 0
      %s17 = sshll.u32 %s0, 4
      %s18 = int_to_ptr.hbm [resolvable:$true] %s17
      %s19 = sshll.u32 [#allocation3], 4
      %s20 = int_to_ptr.vmem [resolvable:$true] %s19
      %25 = dma.hbm_to_vmem [thread:$0]  %s18, 256, %s20, [#allocation4], 128, 128, 8
    $region5: #{tpu_custom_call.1} parent=1 // pred_fallthru
      _
    // Predicated region
    $region6: #{tpu_custom_call.1} parent=1 // pred_check
      _
    $region7: #{tpu_custom_call.1} parent=1 // pred_check_branch
      %27 = sbr.rel (0) target = $region9
    $region8: #{tpu_custom_call.1} parent=1 // pred_region
      %29 = vsyncadd [#allocation7], 0
      %s31 = sshll.u32 %s1, 4
      %s32 = int_to_ptr.hbm [resolvable:$true] %s31
      %s33 = sshll.u32 [#allocation6], 4
      %s34 = int_to_ptr.vmem [resolvable:$true] %s33
      %36 = dma.hbm_to_vmem [thread:$0]  %s32, 16, %s34, [#allocation7]
    $region9: #{tpu_custom_call.1} parent=1 // pred_fallthru
      _
    // Predicated region
    $region10: #{tpu_custom_call.1} parent=1 // pred_check
      _
    $region11: #{tpu_custom_call.1} parent=1 // pred_check_branch
      %38 = sbr.rel (0) target = $region13
    $region12: #{tpu_custom_call.1} parent=1 // pred_region
      _
    $region13: #{tpu_custom_call.1} parent=1 // pred_fallthru
      _
    // Predicated region
    $region14: #{tpu_custom_call.1} parent=1 // pred_check
      _
    $region15: #{tpu_custom_call.1} parent=1 // pred_check_branch
      %40 = sbr.rel (0) target = $region17
    $region16: #{tpu_custom_call.1} parent=1 // pred_region
      %42 = vsyncadd [#allocation7], 0
      %s43 = sshll.u32 %s3, 4
      %s44 = int_to_ptr.hbm [resolvable:$true] %s43
      %s45 = sshll.u32 [#allocation8], 4
      %s46 = int_to_ptr.vmem [resolvable:$true] %s45
      %51 = dma.hbm_to_vmem [thread:$0]  %s44, 256, %s46, [#allocation7], 64, 64, 4
    $region17: #{tpu_custom_call.1} parent=1 // pred_fallthru
      _
    // Predicated region
    $region18: #{tpu_custom_call.1} parent=1 // pred_check
      _
    $region19: #{tpu_custom_call.1} parent=1 // pred_check_branch
      %53 = sbr.rel (0) target = $region21
    $region20: #{tpu_custom_call.1} parent=1 // pred_region
      _
    $region21: #{tpu_custom_call.1} parent=1 // pred_fallthru
      _
    // Predicated region
    $region22: #{tpu_custom_call.1} parent=1 // pred_check
      _
    $region23: #{tpu_custom_call.1} parent=1 // pred_check_branch
      %55 = sbr.rel (0) target = $region25
    $region24: #{tpu_custom_call.1} parent=1 // pred_region
      %57 = dma.done [#allocation4], 256
    $region25: #{tpu_custom_call.1} parent=1 // pred_fallthru
      _
    // Predicated region
    $region26: #{tpu_custom_call.1} parent=1 // pred_check
      _
    $region27: #{tpu_custom_call.1} parent=1 // pred_check_branch
      %59 = sbr.rel (0) target = $region29
    $region28: #{tpu_custom_call.1} parent=1 // pred_region
      %61 = dma.done [#allocation7], 16
    $region29: #{tpu_custom_call.1} parent=1 // pred_fallthru
      _
    // Predicated region
    $region30: #{tpu_custom_call.1} parent=1 // pred_check
      _
    $region31: #{tpu_custom_call.1} parent=1 // pred_check_branch
      %63 = sbr.rel (0) target = $region33
    $region32: #{tpu_custom_call.1} parent=1 // pred_region
      %65 = dma.done [#allocation7], 256
    $region33: #{tpu_custom_call.1} parent=1 // pred_fallthru
      _
    %p67 = scmp.eq.s32.totalorder 0, 0
    // Predicated region
    $region34: #{tpu_custom_call.1} parent=1 // pred_check
      %p68 = pneg %p67
    $region35: #{tpu_custom_call.1} parent=1 // pred_check_branch
      %70 = sbr.rel (%p68) target = $region37
    $region36: #{tpu_custom_call.1} parent=1 // pred_region
      %v71 = vld [vmem:[#allocation3] sm:$0xff]
      %v72 = vld [vmem:[#allocation3 + $0x8] sm:$0xff]
      %v73 = vld [vmem:[#allocation6] sm:$0x1]
      %v74 = vld [vmem:[%s2] sm:$0x1]
      %vm75 = vcmask 261120
      %v76 = vsel %vm75, %v71, 0.0
      %77 = vadd.xlane.f32.xlu0 %v76
      %v78 = vpop.xlane.xlu0 %77
      %v79 = vsel %vm75, %v72, 0.0
      %80 = vadd.xlane.f32.xlu0 %v79
      %v81 = vpop.xlane.xlu0 %80
      %v82 = vrcp.pop 32.0
      %v83 = vmul.f32 32.0, %v82
      %v84 = vsub.f32 1.0, %v83
      %v85 = vmul.f32 %v82, %v84
      %v86 = vadd.f32 %v82, %v85
      %vm87 = vweird.f32 %v82
      %v88 = vsel %vm87, %v82, %v86
      %v89 = vmul.f32 %v78, %v88
      %v90 = vmul.f32 %v81, %v88
      %v91 = vsub.f32 %v71, %v89
      %v92 = vsub.f32 %v72, %v90
      %v93 = vmul.f32 %v91, %v91
      %v94 = vmul.f32 %v92, %v92
      %v95 = vsel %vm75, %v93, 0.0
      %96 = vadd.xlane.f32.xlu0 %v95
      %v97 = vpop.xlane.xlu0 %96
      %v98 = vsel %vm75, %v94, 0.0
      %99 = vadd.xlane.f32.xlu0 %v98
      %v100 = vpop.xlane.xlu0 %99
      %v101 = vrcp.pop 31.0
      %v102 = vmul.f32 31.0, %v101
      %v103 = vsub.f32 1.0, %v102
      %v104 = vmul.f32 %v101, %v103
      %v105 = vadd.f32 %v101, %v104
      %vm106 = vweird.f32 %v101
      %v107 = vsel %vm106, %v101, %v105
      %v108 = vmul.f32 %v97, %v107
      %v109 = vmul.f32 %v100, %v107
      %v110 = vrsqrt.pop %v108
      %v111 = vmul.f32 %v110, %v108
      %v112 = vmul.f32 %v111, %v110
      %v113 = vmul.f32 0.5, %v112
      %v114 = vsub.f32 1.5, %v113
      %v115 = vmul.f32 %v110, %v114
      %v116 = vmul.f32 %v108, %v115
      %vm117 = vcmp.eq.f32.partialorder %v108, inf
      %v118 = vsel %vm117, %v108, %v116
      %vm119 = vcmp.eq.f32.partialorder %v108, 0.0
      %v120 = vand.u32 %v108, 2147483648
      %v121 = vsel %vm119, %v120, %v118
      %v122 = vrsqrt.pop %v109
      %v123 = vmul.f32 %v122, %v109
      %v124 = vmul.f32 %v123, %v122
      %v125 = vmul.f32 0.5, %v124
      %v126 = vsub.f32 1.5, %v125
      %v127 = vmul.f32 %v122, %v126
      %v128 = vmul.f32 %v109, %v127
      %vm129 = vcmp.eq.f32.partialorder %v109, inf
      %v130 = vsel %vm129, %v109, %v128
      %vm131 = vcmp.eq.f32.partialorder %v109, 0.0
      %v132 = vand.u32 %v109, 2147483648
      %v133 = vsel %vm131, %v132, %v130
      %v134 = vadd.f32 %v121, 1e-06
      %v135 = vadd.f32 %v133, 1e-06
      %v136 = vrcp.pop %v134
      %v137 = vrcp.pop %v135
      %v138 = vmul.f32 %v91, %v136
      %v139 = vmul.f32 %v92, %v137
      %v141 = vperm.slane %v73, 0
      %v143 = vmul.f32 %v138, %v141
      %v144 = vmul.f32 %v139, %v141
      %v146 = vperm.slane %v74, 0
      %v148 = vadd.f32 %v143, %v146
      %v149 = vadd.f32 %v144, %v146
      %v150 = vpack.c.bf16 %v148, %v148
      %v151 = vpack.c.bf16 %v149, %v149
      %vm152 = vcmask 257024
      %153 = vst.msk [vmem:[#allocation2] sm:$0xf] %vm152, %v150
      %154 = vst.msk [vmem:[#allocation2 + $0x4] sm:$0xf] %vm152, %v151
    $region37: #{tpu_custom_call.1} parent=1 // pred_fallthru
      _
    %v155 = vld [vmem:[#allocation2] sm:$0xf]
    %v156 = vld [vmem:[#allocation2 + $0x4] sm:$0xf]
    %v157 = vld [vmem:[#allocation8] sm:$0xf]
    %v158 = vld [vmem:[#allocation8 + $0x4] sm:$0xf]
    %v159 = vld [vmem:[#allocation8 + $0x8] sm:$0xf]
    %v160 = vld [vmem:[#allocation8 + $0xc] sm:$0xf]
    %v163 = vunpack.c.l.b16 %v155
    %v164 = vunpack.c.l.b16 %v156
    %v165 = vpack.c.b16 %v164, %v163
    %v170 = vunpack.c.l.b16 %v157
    %v171 = vunpack.c.l.b16 %v158
    %v172 = vunpack.c.l.b16 %v159
    %v173 = vunpack.c.l.b16 %v160
    %v174 = vpack.c.b16 %v171, %v170
    %v175 = vpack.c.b16 %v173, %v172
    %vm178 = vcmask 261120
    %v180 = vsel %vm178, %v165, 0
    %182 = vmatpush.bf16.msra.mxu0 0
    %183 = vmatpush.bf16.msra.mxu0 0
    %184 = vmatpush.bf16.msra.mxu0 0
    %185 = vmatpush.bf16.msra.mxu0 0
    %186 = vmatpush.bf16.msra.mxu0 0
    %187 = vmatpush.bf16.msra.mxu0 0
    %188 = vmatpush.bf16.msra.mxu0 %v175
    %189 = vmatpush.bf16.msra.mxu0 %v174
    %190 = vmatmul.bf16.gmra.mxu0 %v180
    %v191 = vpop.f32.mrf.mxu0
    %v192 = vadd.f32 0.0, %v191
    %v193 = vpop.f32.mrf.mxu0
    %v194 = vadd.f32 0.0, %v193
    %195 = vdwg.mxu0
    %v196 = vld [vmem:[#allocation3] sm:$0xff]
    %v197 = vld [vmem:[#allocation3 + $0x8] sm:$0xff]
    %v198 = vadd.f32 %v196, %v192
    %v199 = vadd.f32 %v197, %v194
    %v200 = vld [vmem:[%s4] sm:$0x1]
    %v202 = vperm.slane %v200, 0
    %v204 = vadd.f32 %v198, %v202
    %v205 = vadd.f32 %v199, %v202
    %206 = vst.msk [vmem:[#allocation9] sm:$0xff] %vm178, %v204
    %207 = vst.msk [vmem:[#allocation9 + $0x8] sm:$0xff] %vm178, %v205
    // Predicated region
    $region38: #{tpu_custom_call.1} parent=1 // pred_check
      _
    $region39: #{tpu_custom_call.1} parent=1 // pred_check_branch
      %209 = sbr.rel (0) target = $region41
    $region40: #{tpu_custom_call.1} parent=1 // pred_region
      %211 = vsyncadd [#allocation5], 0
      %s212 = sshll.u32 [#allocation9], 4
      %s213 = int_to_ptr.vmem [resolvable:$true] %s212
      %s214 = sshll.u32 %s5, 4
      %s215 = int_to_ptr.hbm [resolvable:$true] %s214
      %220 = dma.vmem_to_hbm [thread:$0]  %s213, 256, %s215, [#allocation5], 128, 128, 8
    $region41: #{tpu_custom_call.1} parent=1 // pred_fallthru
      _
    // Predicated region
    $region42: #{tpu_custom_call.1} parent=1 // pred_check
      _
    $region43: #{tpu_custom_call.1} parent=1 // pred_check_branch
      %222 = sbr.rel (0) target = $region45
    $region44: #{tpu_custom_call.1} parent=1 // pred_region
      %224 = dma.done [#allocation5], 256
    $region45: #{tpu_custom_call.1} parent=1 // pred_fallthru
      _
    %225 = vsyncpa [#allocation4], 1
    %226 = vsyncpa [#allocation7], 1
    %227 = vsyncpa [#allocation5], 1

</llo_original>
